<compile_context>
chip_gen: v6e
topology: v6e:2x2x1
jax: 0.10.0
libtpu: 0.0.40
codegen_flags: <defaults>
</compile_context>

<pallas_src>
import functools

import jax
import jax.numpy as jnp
from jax import lax
from jax.experimental import pallas as pl
from jax.experimental.pallas import tpu as pltpu

LANES = 128
STD_XY = 0.1   # std for dx, dy  (lanes with lane % 4 in {0, 1})
STD_WH = 0.2   # std for dw, dh  (lanes with lane % 4 in {2, 3}) == 2 * STD_XY

assert LANES % 4 == 0  # invariant: a box never straddles a 128-lane row


def _round_up(x, m):
    return ((x + m - 1) // m) * m


def _bbox_transform_kernel(a_ref, r_ref, o_ref, *, clip_hw=None):
    # Tiles are (TR, 128), lane-interleaved: lane l holds coordinate l % 4 of
    # box (row*32 + l//4): x1,y1,x2,y2 for anchors / dx,dy,dw,dh for regression.
    # Compute in f32 regardless of I/O dtype (bf16-safe, exp precision).
    a = a_ref[...].astype(jnp.float32)
    d = r_ref[...].astype(jnp.float32) * STD_XY          # uniform *0.1; hi lanes rescaled in exp

    lane = lax.broadcasted_iota(jnp.int32, a.shape, dimension=1)
    is_lo = (lane & 2) == 0                               # lane % 4 in {0, 1}

    # Shift lanes by +2 (roll amount 126 == -2 mod 128) so x2/y2 (and the
    # scaled dw/dh) line up over the x1/y1 lanes.  Wrapped lanes only land on
    # positions the final select discards.
    a_hi = pltpu.roll(a, shift=LANES - 2, axis=1)         # lane i <- a[(i + 2) % 128]
    d_hi = pltpu.roll(d, shift=LANES - 2, axis=1)

    size = a_hi - a                                       # wa, ha   (valid on lo lanes only)
    pre_ctr = a + size * (0.5 + d)                        # x_center + dx*wa (center folded in)
    pred = jnp.exp(d_hi + d_hi) * size                    # exp(dw*0.2)*wa; 2*d_hi since d = r*0.1

    half = 0.5 * pred
    mins = pre_ctr - half                                 # xmin, ymin on lo lanes
    maxs = pre_ctr + half                                 # xmax, ymax on lo lanes

    # Move xmax/ymax onto the hi lanes (lane % 4 in {2, 3}) and interleave.
    maxs_hi = pltpu.roll(maxs, shift=2, axis=1)           # lane i <- maxs[(i - 2) % 128]
    out = jnp.where(is_lo, mins, maxs_hi)

    if clip_hw is not None:                               # optional fused ClipBoxes
        h, w = clip_hw
        hi_bound = jnp.where((lane & 3) == 2, float(w) - 1.0, float(h) - 1.0)
        out = jnp.where(is_lo, jnp.maximum(out, 0.0), jnp.minimum(out, hi_bound))

    o_ref[...] = out.astype(o_ref.dtype)                  # single lane-dense store


def bbox_transform(anchors, regression, *, clip_hw=None, tile_rows=2048,
                   min_grid_steps=2):
    """anchors, regression: float [B, N, 4] -> decoded boxes [B, N, 4].

    clip_hw: optional (height, width) to fuse the downstream ClipBoxes clamp.
    """
    B, N, C = anchors.shape
    assert C == 4 and regression.shape == (B, N, 4)
    dtype = anchors.dtype
    # Sublane granularity: 8 rows for 32-bit dtypes, 16 for 16-bit (packing).
    sub = 8 if jnp.dtype(dtype).itemsize >= 4 else 16

    total = B * N * 4
    rows = pl.cdiv(total, LANES)                          # 128-lane rows
    padded_total = rows * LANES

    a_flat = anchors.reshape(-1)                          # free reshapes
    r_flat = regression.reshape(-1)
    if padded_total != total:
        # Minimal tail pad (< 512 B) only so the (rows, 128) reshape exists;
        # exp(0) = 1 so padded lanes stay finite.  No pad when N % 32 == 0.
        pad = padded_total - total
        a_flat = jnp.pad(a_flat, (0, pad))
        r_flat = jnp.pad(r_flat, (0, pad))

    a2 = a_flat.reshape(rows, LANES)
    r2 = r_flat.reshape(rows, LANES)

    # Tile: as large as tile_rows allows, but capped so the grid has at least
    # `min_grid_steps` steps (both v7x TensorCores get work on the "parallel"
    # axis).  Partial last block is handled by Pallas (padded read, masked
    # write); garbage in padded rows stays in those rows (rolls are lane-wise).
    tr_cap = _round_up(pl.cdiv(rows, min_grid_steps), sub)
    tr = max(sub, min(_round_up(tile_rows, sub), tr_cap))
    grid = pl.cdiv(rows, tr)

    spec = pl.BlockSpec((tr, LANES), lambda i: (i, 0))
    out2 = pl.pallas_call(
        functools.partial(_bbox_transform_kernel, clip_hw=clip_hw),
        out_shape=jax.ShapeDtypeStruct((rows, LANES), dtype),
        grid_spec=pl.GridSpec(
            grid=(grid,),
            in_specs=[spec, spec],
            out_specs=spec,
        ),
        compiler_params=pltpu.CompilerParams(
            dimension_semantics=("parallel",),            # megacore sharding on v7x
        ),
    )(a2, r2)

    out_flat = out2.reshape(-1)
    if padded_total != total:
        out_flat = out_flat[:total]
    return out_flat.reshape(B, N, 4)


# ----------------------------- references -----------------------------------

def _bbox_transform_ref(anchors, regression):
    std = jnp.asarray([0.1, 0.1, 0.2, 0.2], dtype=jnp.float32)
    anchors = anchors.astype(jnp.float32)
    regression = regression.astype(jnp.float32)
    wa = anchors[..., 2] - anchors[..., 0]
    ha = anchors[..., 3] - anchors[..., 1]
    x_centers_a = anchors[..., 0] + 0.5 * wa
    y_centers_a = anchors[..., 1] + 0.5 * ha
    dx = regression[:, :, 0] * std[0]
    dy = regression[:, :, 1] * std[1]
    dw = regression[:, :, 2] * std[2]
    dh = regression[:, :, 3] * std[3]
    pre_ctr_x = x_centers_a + dx * wa
    pre_ctr_y = y_centers_a + dy * ha
    pred_w = jnp.exp(dw) * wa
    pred_h = jnp.exp(dh) * ha
    xmin = pre_ctr_x - 0.5 * pred_w
    ymin = pre_ctr_y - 0.5 * pred_h
    xmax = pre_ctr_x + 0.5 * pred_w
    ymax = pre_ctr_y + 0.5 * pred_h
    return jnp.stack([xmin, ymin, xmax, ymax], axis=2)


def _clip_ref(boxes, h, w):
    xmin = jnp.maximum(boxes[..., 0], 0.0)
    ymin = jnp.maximum(boxes[..., 1], 0.0)
    xmax = jnp.minimum(boxes[..., 2], w - 1.0)
    ymax = jnp.minimum(boxes[..., 3], h - 1.0)
    return jnp.stack([xmin, ymin, xmax, ymax], axis=-1)


def _make_inputs(key, B, N, dtype=jnp.float32):
    k1, k2, k3 = jax.random.split(key, 3)
    xy1 = jax.random.uniform(k1, (B, N, 2), dtype=jnp.float32) * 100.0
    wh = jax.random.uniform(k2, (B, N, 2), dtype=jnp.float32) * 50.0 + 1.0
    anchors = jnp.concatenate([xy1, xy1 + wh], axis=-1)      # x1<x2, y1<y2
    regression = jax.random.normal(k3, (B, N, 4), dtype=jnp.float32)
    return anchors.astype(dtype), regression.astype(dtype)


if __name__ == "__main__":
    key = jax.random.PRNGKey(0)
    k_a, k_b, k_c = jax.random.split(key, 3)

    # Main case (f32): B*N*4 = 32768 -> 256 lane-rows, no pad, no slice,
    # grid of 2 parallel steps (one per v7x TensorCore).
    B, N = 2, 4096
    anchors, regression = _make_inputs(k_a, B, N)
    out = jax.block_until_ready(bbox_transform(anchors, regression))
    ref = _bbox_transform_ref(anchors, regression)
    assert out.shape == (B, N, 4)
    assert jnp.allclose(out, ref, atol=1e-3, rtol=1e-4), "main case mismatch"

    # Ragged case: N=1000 -> 63 lane-rows, minimal 64-element tail pad,
    # partial last block handled by Pallas (masked writes).
    B2, N2 = 2, 1000
    anchors2, regression2 = _make_inputs(k_b, B2, N2)
    out2 = jax.block_until_ready(bbox_transform(anchors2, regression2))
    ref2 = _bbox_transform_ref(anchors2, regression2)
    assert out2.shape == (B2, N2, 4)
    assert jnp.allclose(out2, ref2, atol=1e-3, rtol=1e-4), "ragged case mismatch"

    # Fused ClipBoxes case (optional downstream consumer), same ragged inputs.
    H_img, W_img = 512.0, 640.0
    out2c = jax.block_until_ready(
        bbox_transform(anchors2, regression2, clip_hw=(H_img, W_img)))
    ref2c = _clip_ref(ref2, H_img, W_img)
    assert jnp.allclose(out2c, ref2c, atol=1e-3, rtol=1e-4), "clip case mismatch"

    # bf16 I/O case: half the HBM traffic, compute upcast to f32 in-kernel.
    anchors3, regression3 = _make_inputs(k_c, B, N, dtype=jnp.bfloat16)
    out3 = jax.block_until_ready(bbox_transform(anchors3, regression3))
    ref3 = _bbox_transform_ref(anchors3, regression3)
    assert out3.dtype == jnp.bfloat16 and out3.shape == (B, N, 4)
    assert jnp.allclose(out3.astype(jnp.float32), ref3, atol=1.0, rtol=1e-2), \
        "bf16 case mismatch"

    print("KERNEL_OK")
</pallas_src>

<mosaic_0001>
module attributes {stable_mosaic.version = 11 : i64} {
  func.func @_bbox_transform_kernel(%arg0: i32, %arg1: memref<128x128xf32, #tpu.memory_space<vmem>>, %arg2: memref<128x128xf32, #tpu.memory_space<vmem>>, %arg3: memref<128x128xf32, #tpu.memory_space<vmem>>) attributes {dimension_semantics = [#tpu.dimension_semantics<parallel>], iteration_bounds = array<i64: 2>, scalar_prefetch = 0 : i64, scratch_operands = 0 : i64, tpu.core_type = #tpu.core_type<tc>, window_params = [{transform_indices = @transform_0, window_bounds = array<i64: 128, 128>}, {transform_indices = @transform_1, window_bounds = array<i64: 128, 128>}, {transform_indices = @transform_2, window_bounds = array<i64: 128, 128>}]} {
    %c0 = arith.constant 0 : index
    %c0_0 = arith.constant 0 : index
    %0 = vector.load %arg1[%c0, %c0_0] : memref<128x128xf32, #tpu.memory_space<vmem>>, vector<128x128xf32>
    %c0_1 = arith.constant 0 : index
    %c0_2 = arith.constant 0 : index
    %1 = vector.load %arg2[%c0_1, %c0_2] : memref<128x128xf32, #tpu.memory_space<vmem>>, vector<128x128xf32>
    %cst = arith.constant 1.000000e-01 : f32
    %2 = vector.broadcast %cst : f32 to vector<128x128xf32>
    %3 = arith.mulf %1, %2 : vector<128x128xf32>
    %4 = tpu.iota {dimensions = array<i32: 1>} : vector<128x128xi32>
    %c2_i32 = arith.constant 2 : i32
    %5 = vector.broadcast %c2_i32 : i32 to vector<128x128xi32>
    %6 = arith.andi %4, %5 : vector<128x128xi32>
    %c0_i32 = arith.constant 0 : i32
    %7 = vector.broadcast %c0_i32 : i32 to vector<128x128xi32>
    %8 = arith.cmpi eq, %6, %7 : vector<128x128xi32>
    %c126_i32 = arith.constant 126 : i32
    %9 = tpu.dynamic_rotate %0 by %c126_i32 dim 1 : vector<128x128xf32>, i32 -> vector<128x128xf32>
    %c126_i32_3 = arith.constant 126 : i32
    %10 = tpu.dynamic_rotate %3 by %c126_i32_3 dim 1 : vector<128x128xf32>, i32 -> vector<128x128xf32>
    %11 = arith.subf %9, %0 : vector<128x128xf32>
    %cst_4 = arith.constant 5.000000e-01 : f32
    %12 = vector.broadcast %cst_4 : f32 to vector<128x128xf32>
    %13 = arith.addf %12, %3 : vector<128x128xf32>
    %14 = arith.mulf %11, %13 : vector<128x128xf32>
    %15 = arith.addf %0, %14 : vector<128x128xf32>
    %16 = arith.addf %10, %10 : vector<128x128xf32>
    %17 = math.exp %16 : vector<128x128xf32>
    %18 = arith.mulf %17, %11 : vector<128x128xf32>
    %cst_5 = arith.constant 5.000000e-01 : f32
    %19 = vector.broadcast %cst_5 : f32 to vector<128x128xf32>
    %20 = arith.mulf %19, %18 : vector<128x128xf32>
    %21 = arith.subf %15, %20 : vector<128x128xf32>
    %22 = arith.addf %15, %20 : vector<128x128xf32>
    %c2_i32_6 = arith.constant 2 : i32
    %23 = tpu.dynamic_rotate %22 by %c2_i32_6 dim 1 : vector<128x128xf32>, i32 -> vector<128x128xf32>
    %24 = arith.select %8, %21, %23 : vector<128x128xi1>, vector<128x128xf32>
    %c0_7 = arith.constant 0 : index
    %c0_8 = arith.constant 0 : index
    %25 = vector.load %arg3[%c0_7, %c0_8] : memref<128x128xf32, #tpu.memory_space<vmem>>, vector<128x128xf32>
    tpu.vector_store %arg3[%c0_7, %c0_8], %24 {strides = array<i32>} : memref<128x128xf32, #tpu.memory_space<vmem>>, vector<128x128xf32>,
    return
  }
  func.func @transform_0(%arg0: i32) -> (i32, i32) {
    %c0_i32 = arith.constant 0 : i32
    %c0_i32_0 = arith.constant 0 : i32
    return %arg0, %c0_i32 : i32, i32
  }
  func.func @transform_1(%arg0: i32) -> (i32, i32) {
    %c0_i32 = arith.constant 0 : i32
    %c0_i32_0 = arith.constant 0 : i32
    return %arg0, %c0_i32 : i32, i32
  }
  func.func @transform_2(%arg0: i32) -> (i32, i32) {
    %c0_i32 = arith.constant 0 : i32
    %c0_i32_0 = arith.constant 0 : i32
    return %arg0, %c0_i32 : i32, i32
  }
}

</mosaic_0001>

<llo_original>
// kernel: tpu_custom_call.1
$region0: #{tpu_custom_call.1}
  #allocation0 [shape = 'u32[]', space=smem, size = 0x4, offset = 0x4, fixed_abs, tag = 'smem constant byte address 0x4 - core index']
  #allocation1 [shape = 'u32[144,128]{1,0:T(1,128)}', space=vmem, size = 0x12000, scoped, tag = 'internal scratch']
  %s0 = inlined_call_operand.hbm [shape: f32[256,128], index: 0, kind: input, shape index: {}]
  %s1 = inlined_call_operand.hbm [shape: f32[256,128], index: 1, kind: input, shape index: {}]
  %s2 = inlined_call_operand.hbm [shape: f32[256,128], index: 2, kind: output, shape index: {}]
  %s3 = sld [smem:[#allocation0]]
  $region49: #{tpu_custom_call.1} parent=0
    _
  %s5 = ssub.s32 1, %s3
  %s6 = scalar_select 0, %s5, %s3
  $region1: #{tpu_custom_call.1} parent=0
    #allocation2 [shape = 'u8[131072]{0}', space=vmem, size = 0x20000, scoped, tag = 'input window, operand 0']
    #allocation3 [shape = 's32[2]{0}', space=sflag, size = 0x8, scoped, tag = 'scoped memory for tpu_custom_call.1']
    #allocation4 [shape = 's32[2]{0}', space=sflag, size = 0x8, scoped, tag = 'scoped memory for tpu_custom_call.1']
    #allocation5 [shape = 'u8[131072]{0}', space=vmem, size = 0x20000, scoped, tag = 'input window, operand 1']
    #allocation6 [shape = 's32[2]{0}', space=sflag, size = 0x8, scoped, tag = 'scoped memory for tpu_custom_call.1']
    #allocation7 [shape = 'u8[131072]{0}', space=vmem, size = 0x20000, scoped, tag = 'output window, operand 0']
    %7 = vsyncpa [#allocation3], 0
    %s8 = scalar_lea.sflag [#allocation3], 1
    %9 = vsyncpa %s8, 0
    %10 = vsyncpa [#allocation6], 0
    %s11 = scalar_lea.sflag [#allocation6], 1
    %12 = vsyncpa %s11, 0
    %13 = vsyncpa [#allocation4], 0
    %s14 = scalar_lea.sflag [#allocation4], 1
    %15 = vsyncpa %s14, 0
    loop: start=0, step=1, limit=4
    $region2: #{tpu_custom_call.1} parent=1 // loop_pre_header
      _
    $region3: #{tpu_custom_call.1} parent=1 // loop_header
      %s17 = sphi 0, %s21
      %p18 = scmp.ge.s32.totalorder %s17, 4
      %s27 = sphi 0, %s29
      %s30 = sphi 0, %s27
      %s31 = sphi 0, %s30
      %s47 = sphi 0, %s31
      %s53 = sphi 0, %s55
      %s56 = sphi 0, %s53
      %s57 = sphi 0, %s56
      %s73 = sphi 0, %s57
      %s79 = sphi 0, %s81
      %s82 = sphi 0, %s79
      %s83 = sphi 0, %s82
      %s99 = sphi 0, %s83
    $region4: #{tpu_custom_call.1} parent=1 // loop_header_branch
      %20 = sbr.rel (%p18) target = $region8
    $region5: #{tpu_custom_call.1} parent=1 // loop_body
      %s22 = ssub.s32 %s17, 1
      %s23 = ssub.s32 %s17, 2
      %s24 = sadd.s32 %s17, 1
      %s25 = ssub.s32 %s17, %s24
      %p26 = scmp.eq.s32.totalorder %s25, 0
      %s28 = sadd.s32 %s27, 1
      %s29 = scalar_select %p26, %s27, %s28
      %p32 = pneg %p26
      %p33 = scmp.eq.s32.totalorder %s17, 1
      %p34 = por %p32, %p33
      %p35 = scmp.ne.s32.totalorder %s27, %s30
      %p36 = scmp.eq.s32.totalorder %s17, 0
      %p37 = por %p35, %p36
      %p38 = scmp.ne.s32.totalorder %s27, %s30
      %p39 = scmp.eq.s32.totalorder %s22, 1
      %p40 = por %p38, %p39
      %p41 = scmp.ne.s32.totalorder %s30, %s31
      %p42 = scmp.eq.s32.totalorder %s22, 0
      %p43 = por %p41, %p42
      %p44 = scmp.ne.s32.totalorder %s30, %s31
      %p45 = scmp.eq.s32.totalorder %s23, 1
      %p46 = por %p44, %p45
      %p48 = scmp.ne.s32.totalorder %s31, %s47
      %p49 = scmp.eq.s32.totalorder %s23, 0
      %p50 = por %p48, %p49
      %s51 = ssub.s32 %s17, %s24
      %p52 = scmp.eq.s32.totalorder %s51, 0
      %s54 = sadd.s32 %s53, 1
      %s55 = scalar_select %p52, %s53, %s54
      %p58 = pneg %p52
      %p59 = scmp.eq.s32.totalorder %s17, 1
      %p60 = por %p58, %p59
      %p61 = scmp.ne.s32.totalorder %s53, %s56
      %p62 = scmp.eq.s32.totalorder %s17, 0
      %p63 = por %p61, %p62
      %p64 = scmp.ne.s32.totalorder %s53, %s56
      %p65 = scmp.eq.s32.totalorder %s22, 1
      %p66 = por %p64, %p65
      %p67 = scmp.ne.s32.totalorder %s56, %s57
      %p68 = scmp.eq.s32.totalorder %s22, 0
      %p69 = por %p67, %p68
      %p70 = scmp.ne.s32.totalorder %s56, %s57
      %p71 = scmp.eq.s32.totalorder %s23, 1
      %p72 = por %p70, %p71
      %p74 = scmp.ne.s32.totalorder %s57, %s73
      %p75 = scmp.eq.s32.totalorder %s23, 0
      %p76 = por %p74, %p75
      %s77 = ssub.s32 %s17, %s24
      %p78 = scmp.eq.s32.totalorder %s77, 0
      %s80 = sadd.s32 %s79, 1
      %s81 = scalar_select %p78, %s79, %s80
      %p84 = pneg %p78
      %p85 = scmp.eq.s32.totalorder %s17, 1
      %p86 = por %p84, %p85
      %p87 = scmp.ne.s32.totalorder %s79, %s82
      %p88 = scmp.eq.s32.totalorder %s17, 0
      %p89 = por %p87, %p88
      %p90 = scmp.ne.s32.totalorder %s79, %s82
      %p91 = scmp.eq.s32.totalorder %s22, 1
      %p92 = por %p90, %p91
      %p93 = scmp.ne.s32.totalorder %s82, %s83
      %p94 = scmp.eq.s32.totalorder %s22, 0
      %p95 = por %p93, %p94
      %p96 = scmp.ne.s32.totalorder %s82, %s83
      %p97 = scmp.eq.s32.totalorder %s23, 1
      %p98 = por %p96, %p97
      %p100 = scmp.ne.s32.totalorder %s83, %s99
      %p101 = scmp.eq.s32.totalorder %s23, 0
      %p102 = por %p100, %p101
      %p103 = scmp.le.s32.totalorder 1, %s17
      %p104 = scmp.lt.s32.totalorder %s17, 3
      %p105 = pnand %p103, %p104
      %p106 = pneg %p105
      // Predicated region
      $region9: #{tpu_custom_call.1} parent=5 // pred_check
        _
      $region10: #{tpu_custom_call.1} parent=5 // pred_check_branch
        %108 = sbr.rel (%p105) target = $region12
      $region11: #{tpu_custom_call.1} parent=5 // pred_region
        %s109 = ssub.s32 %s17, 1
      $region12: #{tpu_custom_call.1} parent=5 // pred_fallthru
        _
      %p110 = scmp.lt.s32.totalorder %s17, 2
      // Predicated region
      $region13: #{tpu_custom_call.1} parent=5 // pred_check
        %p111 = pneg %p110
      $region14: #{tpu_custom_call.1} parent=5 // pred_check_branch
        %113 = sbr.rel (%p111) target = $region16
      $region15: #{tpu_custom_call.1} parent=5 // pred_region
        // Predicated region
        $region17: #{tpu_custom_call.1} parent=15 // pred_check
          %p114 = pneg %p37
        $region18: #{tpu_custom_call.1} parent=15 // pred_check_branch
          %116 = sbr.rel (%p114) target = $region20
        $region19: #{tpu_custom_call.1} parent=15 // pred_region
          %s117 = sand.u32 %s27, 1
          %s118 = scalar_lea.sflag [#allocation3], %s117
          %s119 = sand.u32 %s27, 1
          %s120 = smul.addr %s119, 128
          %s121 = scalar_lea.vmem [#allocation2], %s120
          %s122 = smul.u32 16, %s17
          %s124 = ssub.s32 2048, 2048
          %125 = vsyncadd %s118, %s124
          %s126 = smul.addr %s122, 128
          %s127 = scalar_lea.hbm %s0, %s126
          %s128 = sshll.u32 %s121, 4
          %s129 = int_to_ptr.vmem [resolvable:$true] %s128
          %134 = dma.hbm_to_vmem [thread:$0]  %s127, 2048, %s129, %s118, 128, 128, 8
        $region20: #{tpu_custom_call.1} parent=15 // pred_fallthru
          _
        // Predicated region
        $region21: #{tpu_custom_call.1} parent=15 // pred_check
          %p135 = pneg %p63
        $region22: #{tpu_custom_call.1} parent=15 // pred_check_branch
          %137 = sbr.rel (%p135) target = $region24
        $region23: #{tpu_custom_call.1} parent=15 // pred_region
          %s138 = sand.u32 %s53, 1
          %s139 = scalar_lea.sflag [#allocation6], %s138
          %s140 = sand.u32 %s53, 1
          %s141 = smul.addr %s140, 128
          %s142 = scalar_lea.vmem [#allocation5], %s141
          %s143 = smul.u32 16, %s17
          %s145 = ssub.s32 2048, 2048
          %146 = vsyncadd %s139, %s145
          %s147 = smul.addr %s143, 128
          %s148 = scalar_lea.hbm %s1, %s147
          %s149 = sshll.u32 %s142, 4
          %s150 = int_to_ptr.vmem [resolvable:$true] %s149
          %155 = dma.hbm_to_vmem [thread:$0]  %s148, 2048, %s150, %s139, 128, 128, 8
        $region24: #{tpu_custom_call.1} parent=15 // pred_fallthru
          _
      $region16: #{tpu_custom_call.1} parent=5 // pred_fallthru
        _
      %p156 = scmp.le.s32.totalorder 1, %s17
      %p157 = scmp.lt.s32.totalorder %s17, 3
      %p158 = pnand %p156, %p157
      %p159 = pneg %p158
      // Predicated region
      $region25: #{tpu_custom_call.1} parent=5 // pred_check
        _
      $region26: #{tpu_custom_call.1} parent=5 // pred_check_branch
        %161 = sbr.rel (%p158) target = $region28
      $region27: #{tpu_custom_call.1} parent=5 // pred_region
        %s162 = ssub.s32 %s17, 1
        %s163 = sand.u32 %s30, 1
        %s164 = scalar_lea.sflag [#allocation3], %s163
        %s165 = sand.u32 %s30, 1
        %s166 = smul.addr %s165, 128
        %s167 = scalar_lea.vmem [#allocation2], %s166
        // Predicated region
        $region29: #{tpu_custom_call.1} parent=27 // pred_check
          %p168 = pneg %p43
        $region30: #{tpu_custom_call.1} parent=27 // pred_check_branch
          %170 = sbr.rel (%p168) target = $region32
        $region31: #{tpu_custom_call.1} parent=27 // pred_region
          %171 = dma.done %s164, 2048
        $region32: #{tpu_custom_call.1} parent=27 // pred_fallthru
          _
        %s172 = sand.u32 %s56, 1
        %s173 = scalar_lea.sflag [#allocation6], %s172
        %s174 = sand.u32 %s56, 1
        %s175 = smul.addr %s174, 128
        %s176 = scalar_lea.vmem [#allocation5], %s175
        // Predicated region
        $region33: #{tpu_custom_call.1} parent=27 // pred_check
          %p177 = pneg %p69
        $region34: #{tpu_custom_call.1} parent=27 // pred_check_branch
          %179 = sbr.rel (%p177) target = $region36
        $region35: #{tpu_custom_call.1} parent=27 // pred_region
          %180 = dma.done %s173, 2048
        $region36: #{tpu_custom_call.1} parent=27 // pred_fallthru
          _
        %s181 = sand.u32 %s30, 1
        %s182 = scalar_lea.sflag [#allocation3], %s181
        %s183 = sand.u32 %s30, 1
        %s184 = smul.addr %s183, 128
        %s185 = scalar_lea.vmem [#allocation2], %s184
        %p186 = pneg %p43
        %p187 = pneg %p40
        %s188 = sand.u32 %s56, 1
        %s189 = scalar_lea.sflag [#allocation6], %s188
        %s190 = sand.u32 %s56, 1
        %s191 = smul.addr %s190, 128
        %s192 = scalar_lea.vmem [#allocation5], %s191
        %p193 = pneg %p69
        %p194 = pneg %p66
        %p195 = pneg %p95
        %p196 = pneg %p92
        %s197 = sand.u32 %s82, 1
        %s198 = scalar_lea.sflag [#allocation4], %s197
        %s199 = sand.u32 %s82, 1
        %s200 = smul.addr %s199, 128
        %s201 = scalar_lea.vmem [#allocation7], %s200
        %s202 = smul.u32 16, %s22
        %s203 = smul.u32 16, %s22
        %s204 = smul.u32 16, %s22
        %v205 = vld [vmem:[%s167] sm:$0xff]
        %v206 = vld [vmem:[%s167 + $0x8] sm:$0xff]
        %v207 = vld [vmem:[%s167 + $0x10] sm:$0xff]
        %v208 = vld [vmem:[%s167 + $0x18] sm:$0xff]
        %v209 = vld [vmem:[%s167 + $0x20] sm:$0xff]
        %v210 = vld [vmem:[%s167 + $0x28] sm:$0xff]
        %v211 = vld [vmem:[%s167 + $0x30] sm:$0xff]
        %v212 = vld [vmem:[%s167 + $0x38] sm:$0xff]
        %v213 = vld [vmem:[%s167 + $0x40] sm:$0xff]
        %v214 = vld [vmem:[%s167 + $0x48] sm:$0xff]
        %v215 = vld [vmem:[%s167 + $0x50] sm:$0xff]
        %v216 = vld [vmem:[%s167 + $0x58] sm:$0xff]
        %v217 = vld [vmem:[%s167 + $0x60] sm:$0xff]
        %v218 = vld [vmem:[%s167 + $0x68] sm:$0xff]
        %v219 = vld [vmem:[%s167 + $0x70] sm:$0xff]
        %v220 = vld [vmem:[%s167 + $0x78] sm:$0xff]
        %v221 = vld [vmem:[%s176] sm:$0xff]
        %v222 = vld [vmem:[%s176 + $0x8] sm:$0xff]
        %v223 = vld [vmem:[%s176 + $0x10] sm:$0xff]
        %v224 = vld [vmem:[%s176 + $0x18] sm:$0xff]
        %v225 = vld [vmem:[%s176 + $0x20] sm:$0xff]
        %v226 = vld [vmem:[%s176 + $0x28] sm:$0xff]
        %v227 = vld [vmem:[%s176 + $0x30] sm:$0xff]
        %v228 = vld [vmem:[%s176 + $0x38] sm:$0xff]
        %v229 = vld [vmem:[%s176 + $0x40] sm:$0xff]
        %v230 = vld [vmem:[%s176 + $0x48] sm:$0xff]
        %v231 = vld [vmem:[%s176 + $0x50] sm:$0xff]
        %v232 = vld [vmem:[%s176 + $0x58] sm:$0xff]
        %v233 = vld [vmem:[%s176 + $0x60] sm:$0xff]
        %v234 = vld [vmem:[%s176 + $0x68] sm:$0xff]
        %v235 = vld [vmem:[%s176 + $0x70] sm:$0xff]
        %v236 = vld [vmem:[%s176 + $0x78] sm:$0xff]
        %v237 = vmul.f32 %v221, 0.1
        %v238 = vmul.f32 %v222, 0.1
        %v239 = vmul.f32 %v223, 0.1
        %v240 = vmul.f32 %v224, 0.1
        %v241 = vmul.f32 %v225, 0.1
        %v242 = vmul.f32 %v226, 0.1
        %v243 = vmul.f32 %v227, 0.1
        %v244 = vmul.f32 %v228, 0.1
        %v245 = vmul.f32 %v229, 0.1
        %v246 = vmul.f32 %v230, 0.1
        %v247 = vmul.f32 %v231, 0.1
        %v248 = vmul.f32 %v232, 0.1
        %v249 = vmul.f32 %v233, 0.1
        %v250 = vmul.f32 %v234, 0.1
        %v251 = vmul.f32 %v235, 0.1
        %v252 = vmul.f32 %v236, 0.1
        %v253 = vlaneseq
        %v254 = vand.u32 %v253, 127
        %v255 = vand.u32 %v254, 2
        %vm256 = vcmp.eq.s32.totalorder %v255, 0
        %257 = vrot.lane.b32.xlu0 %v205, 126
        %v258 = vpop.permute.xlu0 %257
        %259 = vrot.lane.b32.xlu0 %v206, 126
        %v260 = vpop.permute.xlu0 %259
        %261 = vrot.lane.b32.xlu0 %v207, 126
        %v262 = vpop.permute.xlu0 %261
        %263 = vrot.lane.b32.xlu0 %v208, 126
        %v264 = vpop.permute.xlu0 %263
        %265 = vrot.lane.b32.xlu0 %v209, 126
        %v266 = vpop.permute.xlu0 %265
        %267 = vrot.lane.b32.xlu0 %v210, 126
        %v268 = vpop.permute.xlu0 %267
        %269 = vrot.lane.b32.xlu0 %v211, 126
        %v270 = vpop.permute.xlu0 %269
        %271 = vrot.lane.b32.xlu0 %v212, 126
        %v272 = vpop.permute.xlu0 %271
        %273 = vrot.lane.b32.xlu0 %v213, 126
        %v274 = vpop.permute.xlu0 %273
        %275 = vrot.lane.b32.xlu0 %v214, 126
        %v276 = vpop.permute.xlu0 %275
        %277 = vrot.lane.b32.xlu0 %v215, 126
        %v278 = vpop.permute.xlu0 %277
        %279 = vrot.lane.b32.xlu0 %v216, 126
        %v280 = vpop.permute.xlu0 %279
        %281 = vrot.lane.b32.xlu0 %v217, 126
        %v282 = vpop.permute.xlu0 %281
        %283 = vrot.lane.b32.xlu0 %v218, 126
        %v284 = vpop.permute.xlu0 %283
        %285 = vrot.lane.b32.xlu0 %v219, 126
        %v286 = vpop.permute.xlu0 %285
        %287 = vrot.lane.b32.xlu0 %v220, 126
        %v288 = vpop.permute.xlu0 %287
        %289 = vrot.lane.b32.xlu0 %v237, 126
        %v290 = vpop.permute.xlu0 %289
        %291 = vrot.lane.b32.xlu0 %v238, 126
        %v292 = vpop.permute.xlu0 %291
        %293 = vrot.lane.b32.xlu0 %v239, 126
        %v294 = vpop.permute.xlu0 %293
        %295 = vrot.lane.b32.xlu0 %v240, 126
        %v296 = vpop.permute.xlu0 %295
        %297 = vrot.lane.b32.xlu0 %v241, 126
        %v298 = vpop.permute.xlu0 %297
        %299 = vrot.lane.b32.xlu0 %v242, 126
        %v300 = vpop.permute.xlu0 %299
        %301 = vrot.lane.b32.xlu0 %v243, 126
        %v302 = vpop.permute.xlu0 %301
        %303 = vrot.lane.b32.xlu0 %v244, 126
        %v304 = vpop.permute.xlu0 %303
        %305 = vrot.lane.b32.xlu0 %v245, 126
        %v306 = vpop.permute.xlu0 %305
        %307 = vrot.lane.b32.xlu0 %v246, 126
        %v308 = vpop.permute.xlu0 %307
        %309 = vrot.lane.b32.xlu0 %v247, 126
        %v310 = vpop.permute.xlu0 %309
        %311 = vrot.lane.b32.xlu0 %v248, 126
        %v312 = vpop.permute.xlu0 %311
        %313 = vrot.lane.b32.xlu0 %v249, 126
        %v314 = vpop.permute.xlu0 %313
        %315 = vrot.lane.b32.xlu0 %v250, 126
        %v316 = vpop.permute.xlu0 %315
        %317 = vrot.lane.b32.xlu0 %v251, 126
        %v318 = vpop.permute.xlu0 %317
        %319 = vrot.lane.b32.xlu0 %v252, 126
        %v320 = vpop.permute.xlu0 %319
        %v321 = vsub.f32 %v258, %v205
        %v322 = vsub.f32 %v260, %v206
        %v323 = vsub.f32 %v262, %v207
        %v324 = vsub.f32 %v264, %v208
        %v325 = vsub.f32 %v266, %v209
        %v326 = vsub.f32 %v268, %v210
        %v327 = vsub.f32 %v270, %v211
        %v328 = vsub.f32 %v272, %v212
        %v329 = vsub.f32 %v274, %v213
        %v330 = vsub.f32 %v276, %v214
        %v331 = vsub.f32 %v278, %v215
        %v332 = vsub.f32 %v280, %v216
        %v333 = vsub.f32 %v282, %v217
        %v334 = vsub.f32 %v284, %v218
        %v335 = vsub.f32 %v286, %v219
        %v336 = vsub.f32 %v288, %v220
        %v337 = vadd.f32 %v237, 0.5
        %v338 = vadd.f32 %v238, 0.5
        %v339 = vadd.f32 %v239, 0.5
        %v340 = vadd.f32 %v240, 0.5
        %v341 = vadd.f32 %v241, 0.5
        %v342 = vadd.f32 %v242, 0.5
        %v343 = vadd.f32 %v243, 0.5
        %v344 = vadd.f32 %v244, 0.5
        %v345 = vadd.f32 %v245, 0.5
        %v346 = vadd.f32 %v246, 0.5
        %v347 = vadd.f32 %v247, 0.5
        %v348 = vadd.f32 %v248, 0.5
        %v349 = vadd.f32 %v249, 0.5
        %v350 = vadd.f32 %v250, 0.5
        %v351 = vadd.f32 %v251, 0.5
        %v352 = vadd.f32 %v252, 0.5
        %v353 = vmul.f32 %v321, %v337
        %v354 = vmul.f32 %v322, %v338
        %v355 = vmul.f32 %v323, %v339
        %v356 = vmul.f32 %v324, %v340
        %v357 = vmul.f32 %v325, %v341
        %v358 = vmul.f32 %v326, %v342
        %v359 = vmul.f32 %v327, %v343
        %v360 = vmul.f32 %v328, %v344
        %v361 = vmul.f32 %v329, %v345
        %v362 = vmul.f32 %v330, %v346
        %v363 = vmul.f32 %v331, %v347
        %v364 = vmul.f32 %v332, %v348
        %v365 = vmul.f32 %v333, %v349
        %v366 = vmul.f32 %v334, %v350
        %v367 = vmul.f32 %v335, %v351
        %v368 = vmul.f32 %v336, %v352
        %v369 = vadd.f32 %v205, %v353
        %v370 = vadd.f32 %v206, %v354
        %v371 = vadd.f32 %v207, %v355
        %v372 = vadd.f32 %v208, %v356
        %v373 = vadd.f32 %v209, %v357
        %v374 = vadd.f32 %v210, %v358
        %v375 = vadd.f32 %v211, %v359
        %v376 = vadd.f32 %v212, %v360
        %v377 = vadd.f32 %v213, %v361
        %v378 = vadd.f32 %v214, %v362
        %v379 = vadd.f32 %v215, %v363
        %v380 = vadd.f32 %v216, %v364
        %v381 = vadd.f32 %v217, %v365
        %v382 = vadd.f32 %v218, %v366
        %v383 = vadd.f32 %v219, %v367
        %v384 = vadd.f32 %v220, %v368
        %v385 = vadd.f32 %v290, %v290
        %v386 = vadd.f32 %v292, %v292
        %v387 = vadd.f32 %v294, %v294
        %v388 = vadd.f32 %v296, %v296
        %v389 = vadd.f32 %v298, %v298
        %v390 = vadd.f32 %v300, %v300
        %v391 = vadd.f32 %v302, %v302
        %v392 = vadd.f32 %v304, %v304
        %v393 = vadd.f32 %v306, %v306
        %v394 = vadd.f32 %v308, %v308
        %v395 = vadd.f32 %v310, %v310
        %v396 = vadd.f32 %v312, %v312
        %v397 = vadd.f32 %v314, %v314
        %v398 = vadd.f32 %v316, %v316
        %v399 = vadd.f32 %v318, %v318
        %v400 = vadd.f32 %v320, %v320
        %v401 = vmul.f32 %v385, 1.442695
        %v402 = vpow.pop %v401
        %v403 = vmul.f32 %v386, 1.442695
        %v404 = vpow.pop %v403
        %v405 = vmul.f32 %v387, 1.442695
        %v406 = vpow.pop %v405
        %v407 = vmul.f32 %v388, 1.442695
        %v408 = vpow.pop %v407
        %v409 = vmul.f32 %v389, 1.442695
        %v410 = vpow.pop %v409
        %v411 = vmul.f32 %v390, 1.442695
        %v412 = vpow.pop %v411
        %v413 = vmul.f32 %v391, 1.442695
        %v414 = vpow.pop %v413
        %v415 = vmul.f32 %v392, 1.442695
        %v416 = vpow.pop %v415
        %v417 = vmul.f32 %v393, 1.442695
        %v418 = vpow.pop %v417
        %v419 = vmul.f32 %v394, 1.442695
        %v420 = vpow.pop %v419
        %v421 = vmul.f32 %v395, 1.442695
        %v422 = vpow.pop %v421
        %v423 = vmul.f32 %v396, 1.442695
        %v424 = vpow.pop %v423
        %v425 = vmul.f32 %v397, 1.442695
        %v426 = vpow.pop %v425
        %v427 = vmul.f32 %v398, 1.442695
        %v428 = vpow.pop %v427
        %v429 = vmul.f32 %v399, 1.442695
        %v430 = vpow.pop %v429
        %v431 = vmul.f32 %v400, 1.442695
        %v432 = vpow.pop %v431
        %v433 = vmul.f32 %v402, %v321
        %v434 = vmul.f32 %v404, %v322
        %v435 = vmul.f32 %v406, %v323
        %v436 = vmul.f32 %v408, %v324
        %v437 = vmul.f32 %v410, %v325
        %v438 = vmul.f32 %v412, %v326
        %v439 = vmul.f32 %v414, %v327
        %v440 = vmul.f32 %v416, %v328
        %v441 = vmul.f32 %v418, %v329
        %v442 = vmul.f32 %v420, %v330
        %v443 = vmul.f32 %v422, %v331
        %v444 = vmul.f32 %v424, %v332
        %v445 = vmul.f32 %v426, %v333
        %v446 = vmul.f32 %v428, %v334
        %v447 = vmul.f32 %v430, %v335
        %v448 = vmul.f32 %v432, %v336
        %v449 = vmul.f32 %v433, 0.5
        %v450 = vmul.f32 %v434, 0.5
        %v451 = vmul.f32 %v435, 0.5
        %v452 = vmul.f32 %v436, 0.5
        %v453 = vmul.f32 %v437, 0.5
        %v454 = vmul.f32 %v438, 0.5
        %v455 = vmul.f32 %v439, 0.5
        %v456 = vmul.f32 %v440, 0.5
        %v457 = vmul.f32 %v441, 0.5
        %v458 = vmul.f32 %v442, 0.5
        %v459 = vmul.f32 %v443, 0.5
        %v460 = vmul.f32 %v444, 0.5
        %v461 = vmul.f32 %v445, 0.5
        %v462 = vmul.f32 %v446, 0.5
        %v463 = vmul.f32 %v447, 0.5
        %v464 = vmul.f32 %v448, 0.5
        %v465 = vsub.f32 %v369, %v449
        %v466 = vsub.f32 %v370, %v450
        %v467 = vsub.f32 %v371, %v451
        %v468 = vsub.f32 %v372, %v452
        %v469 = vsub.f32 %v373, %v453
        %v470 = vsub.f32 %v374, %v454
        %v471 = vsub.f32 %v375, %v455
        %v472 = vsub.f32 %v376, %v456
        %v473 = vsub.f32 %v377, %v457
        %v474 = vsub.f32 %v378, %v458
        %v475 = vsub.f32 %v379, %v459
        %v476 = vsub.f32 %v380, %v460
        %v477 = vsub.f32 %v381, %v461
        %v478 = vsub.f32 %v382, %v462
        %v479 = vsub.f32 %v383, %v463
        %v480 = vsub.f32 %v384, %v464
        %v481 = vadd.f32 %v369, %v449
        %v482 = vadd.f32 %v370, %v450
        %v483 = vadd.f32 %v371, %v451
        %v484 = vadd.f32 %v372, %v452
        %v485 = vadd.f32 %v373, %v453
        %v486 = vadd.f32 %v374, %v454
        %v487 = vadd.f32 %v375, %v455
        %v488 = vadd.f32 %v376, %v456
        %v489 = vadd.f32 %v377, %v457
        %v490 = vadd.f32 %v378, %v458
        %v491 = vadd.f32 %v379, %v459
        %v492 = vadd.f32 %v380, %v460
        %v493 = vadd.f32 %v381, %v461
        %v494 = vadd.f32 %v382, %v462
        %v495 = vadd.f32 %v383, %v463
        %v496 = vadd.f32 %v384, %v464
        %497 = vrot.lane.b32.xlu0 %v481, 2
        %v498 = vpop.permute.xlu0 %497
        %499 = vrot.lane.b32.xlu0 %v482, 2
        %v500 = vpop.permute.xlu0 %499
        %501 = vrot.lane.b32.xlu0 %v483, 2
        %v502 = vpop.permute.xlu0 %501
        %503 = vrot.lane.b32.xlu0 %v484, 2
        %v504 = vpop.permute.xlu0 %503
        %505 = vrot.lane.b32.xlu0 %v485, 2
        %v506 = vpop.permute.xlu0 %505
        %507 = vrot.lane.b32.xlu0 %v486, 2
        %v508 = vpop.permute.xlu0 %507
        %509 = vrot.lane.b32.xlu0 %v487, 2
        %v510 = vpop.permute.xlu0 %509
        %511 = vrot.lane.b32.xlu0 %v488, 2
        %v512 = vpop.permute.xlu0 %511
        %513 = vrot.lane.b32.xlu0 %v489, 2
        %v514 = vpop.permute.xlu0 %513
        %515 = vrot.lane.b32.xlu0 %v490, 2
        %v516 = vpop.permute.xlu0 %515
        %517 = vrot.lane.b32.xlu0 %v491, 2
        %v518 = vpop.permute.xlu0 %517
        %519 = vrot.lane.b32.xlu0 %v492, 2
        %v520 = vpop.permute.xlu0 %519
        %521 = vrot.lane.b32.xlu0 %v493, 2
        %v522 = vpop.permute.xlu0 %521
        %523 = vrot.lane.b32.xlu0 %v494, 2
        %v524 = vpop.permute.xlu0 %523
        %525 = vrot.lane.b32.xlu0 %v495, 2
        %v526 = vpop.permute.xlu0 %525
        %527 = vrot.lane.b32.xlu0 %v496, 2
        %v528 = vpop.permute.xlu0 %527
        %v529 = vsel %vm256, %v465, %v498
        %v530 = vsel %vm256, %v466, %v500
        %v531 = vsel %vm256, %v467, %v502
        %v532 = vsel %vm256, %v468, %v504
        %v533 = vsel %vm256, %v469, %v506
        %v534 = vsel %vm256, %v470, %v508
        %v535 = vsel %vm256, %v471, %v510
        %v536 = vsel %vm256, %v472, %v512
        %v537 = vsel %vm256, %v473, %v514
        %v538 = vsel %vm256, %v474, %v516
        %v539 = vsel %vm256, %v475, %v518
        %v540 = vsel %vm256, %v476, %v520
        %v541 = vsel %vm256, %v477, %v522
        %v542 = vsel %vm256, %v478, %v524
        %v543 = vsel %vm256, %v479, %v526
        %v544 = vsel %vm256, %v480, %v528
        %545 = vst [vmem:[%s201] sm:$0xff] %v529
        %546 = vst [vmem:[%s201 + $0x8] sm:$0xff] %v530
        %547 = vst [vmem:[%s201 + $0x10] sm:$0xff] %v531
        %548 = vst [vmem:[%s201 + $0x18] sm:$0xff] %v532
        %549 = vst [vmem:[%s201 + $0x20] sm:$0xff] %v533
        %550 = vst [vmem:[%s201 + $0x28] sm:$0xff] %v534
        %551 = vst [vmem:[%s201 + $0x30] sm:$0xff] %v535
        %552 = vst [vmem:[%s201 + $0x38] sm:$0xff] %v536
        %553 = vst [vmem:[%s201 + $0x40] sm:$0xff] %v537
        %554 = vst [vmem:[%s201 + $0x48] sm:$0xff] %v538
        %555 = vst [vmem:[%s201 + $0x50] sm:$0xff] %v539
        %556 = vst [vmem:[%s201 + $0x58] sm:$0xff] %v540
        %557 = vst [vmem:[%s201 + $0x60] sm:$0xff] %v541
        %558 = vst [vmem:[%s201 + $0x68] sm:$0xff] %v542
        %559 = vst [vmem:[%s201 + $0x70] sm:$0xff] %v543
        %560 = vst [vmem:[%s201 + $0x78] sm:$0xff] %v544
        %s561 = sand.u32 %s82, 1
        %s562 = scalar_lea.sflag [#allocation4], %s561
        %s563 = sand.u32 %s82, 1
        %s564 = smul.addr %s563, 128
        %s565 = scalar_lea.vmem [#allocation7], %s564
        // Predicated region
        $region37: #{tpu_custom_call.1} parent=27 // pred_check
          %p566 = pneg %p92
        $region38: #{tpu_custom_call.1} parent=27 // pred_check_branch
          %568 = sbr.rel (%p566) target = $region40
        $region39: #{tpu_custom_call.1} parent=27 // pred_region
          %s569 = smul.u32 16, %s22
          %s571 = ssub.s32 2048, 2048
          %572 = vsyncadd %s562, %s571
          %s573 = smul.addr %s569, 128
          %s574 = scalar_lea.hbm %s2, %s573
          %s575 = sshll.u32 %s565, 4
          %s576 = int_to_ptr.vmem [resolvable:$true] %s575
          %581 = dma.vmem_to_hbm [thread:$0]  %s576, 2048, %s574, %s562, 128, 128, 8
        $region40: #{tpu_custom_call.1} parent=27 // pred_fallthru
          _
      $region28: #{tpu_custom_call.1} parent=5 // pred_fallthru
        _
      %p582 = scmp.le.s32.totalorder 2, %s17
      // Predicated region
      $region41: #{tpu_custom_call.1} parent=5 // pred_check
        %p583 = pneg %p582
      $region42: #{tpu_custom_call.1} parent=5 // pred_check_branch
        %585 = sbr.rel (%p583) target = $region44
      $region43: #{tpu_custom_call.1} parent=5 // pred_region
        %s586 = ssub.s32 %s17, 2
        // Predicated region
        $region45: #{tpu_custom_call.1} parent=43 // pred_check
          %p587 = pneg %p98
        $region46: #{tpu_custom_call.1} parent=43 // pred_check_branch
          %589 = sbr.rel (%p587) target = $region48
        $region47: #{tpu_custom_call.1} parent=43 // pred_region
          %s590 = sand.u32 %s83, 1
          %s591 = scalar_lea.sflag [#allocation4], %s590
          %s592 = sand.u32 %s83, 1
          %s593 = smul.addr %s592, 128
          %s594 = scalar_lea.vmem [#allocation7], %s593
          %595 = dma.done %s591, 2048
        $region48: #{tpu_custom_call.1} parent=43 // pred_fallthru
          _
      $region44: #{tpu_custom_call.1} parent=5 // pred_fallthru
        _
    $region6: #{tpu_custom_call.1} parent=1 // loop_footer
      %s21 = sadd.s32 1, %s17
    $region7: #{tpu_custom_call.1} parent=1 // loop_footer_branch
      %16 = sbr.rel target = $region3
    $region8: #{tpu_custom_call.1} parent=1 // loop_exit
      _
    %596 = vsyncpa [#allocation3], 1
    %s597 = scalar_lea.sflag [#allocation3], 1
    %598 = vsyncpa %s597, 1
    %599 = vsyncpa [#allocation6], 1
    %s600 = scalar_lea.sflag [#allocation6], 1
    %601 = vsyncpa %s600, 1
    %602 = vsyncpa [#allocation4], 1
    %s603 = scalar_lea.sflag [#allocation4], 1
    %604 = vsyncpa %s603, 1

</llo_original>
